<compile_context>
chip_gen: v7x
topology: tpu7x:2x2x1
jax: 0.10.0
libtpu: 0.0.40
codegen_flags: <defaults>
</compile_context>

<pallas_src>
import functools

import jax
import jax.numpy as jnp
from jax.experimental import pallas as pl
from jax.experimental.pallas import tpu as pltpu


def lstm_decoder_kernel(x_ref, wx_ref, wh_ref, b_ref, h0_ref, c0_ref,
                        out_ref, hn_ref, cn_ref,
                        xw_ref, h_ref, c_ref, *, seq_len):
    """One grid step = one (batch-block, time-chunk).

    x_ref  : [Tt, Bt, E]        embedded inputs for this chunk (time-major)
    wx_ref : [E, 4H]            input-projection weights, gate cols (i,f,o,g)
    wh_ref : [H, 4H]            hidden-projection weights, same gate order
    b_ref  : [1, 4H]            fused bias (b_ih + b_hh)
    h0/c0  : [Bt, H]            initial state for this batch block
    out_ref: [Tt//P, Bt, P*H]   lane-packed hidden outputs (P steps per row)
    hn/cn  : [Bt, H]            final state
    xw_ref : [Tt, Bt, 4H]       VMEM scratch: hoisted input projection
    h_ref/c_ref : [Bt, H]       VMEM scratch: recurrent carry across chunks
    """
    Tt, Bt, E = x_ref.shape
    H = h0_ref.shape[-1]
    n_groups, _, PH = out_ref.shape
    P = PH // H                      # timesteps packed per lane-dense store

    t_chunk = pl.program_id(1)

    # Initialise the recurrent state from h0/c0 at the first time-chunk.
    @pl.when(t_chunk == 0)
    def _():
        h_ref[...] = h0_ref[...]
        c_ref[...] = c0_ref[...]

    # Hoisted input projection for the whole chunk: one MXU matmul with
    # M = Tt*Bt rows (instead of Tt tiny 8-row matmuls), bias folded in.
    x2d = x_ref[...].reshape(Tt * Bt, E)
    xw = jnp.dot(x2d, wx_ref[...], preferred_element_type=jnp.float32) + b_ref[...]
    xw_ref[...] = xw.reshape(Tt, Bt, 4 * H)

    wh = wh_ref[...]                 # resident for the whole chunk
    chunk_start = t_chunk * Tt
    needs_mask = (seq_len % Tt) != 0  # only the padded tail chunk needs masking

    def group_body(grp, carry):
        h, c = carry
        outs = []
        for p in range(P):           # statically unrolled pack group
            t = grp * P + p
            gates = xw_ref[t] + jnp.dot(h, wh, preferred_element_type=jnp.float32)
            ifo = jax.nn.sigmoid(gates[:, :3 * H])     # i | f | o
            g_act = jnp.tanh(gates[:, 3 * H:])         # g
            i_g = ifo[:, 0 * H:1 * H]
            f_g = ifo[:, 1 * H:2 * H]
            o_g = ifo[:, 2 * H:3 * H]
            c_new = f_g * c + i_g * g_act
            h_new = o_g * jnp.tanh(c_new)
            outs.append(h_new)
            if needs_mask:
                valid = (chunk_start + t) < seq_len
                h = jnp.where(valid, h_new, h)
                c = jnp.where(valid, c_new, c)
            else:
                h, c = h_new, c_new
        # One full-lane (>=128) store per pack group instead of P masked stores.
        out_ref[grp] = jnp.concatenate(outs, axis=-1) if P > 1 else outs[0]
        return h, c

    # Partial unroll: keep ~8 timesteps visible to the scheduler; full unroll
    # only for short chunks.
    unroll = n_groups if n_groups * P <= 16 else max(1, 8 // P)
    h_n, c_n = jax.lax.fori_loop(0, n_groups, group_body,
                                 (h_ref[...], c_ref[...]), unroll=unroll)

    h_ref[...] = h_n
    c_ref[...] = c_n
    hn_ref[...] = h_n
    cn_ref[...] = c_n


def decoder_forward(decoder_input, hidden, params, *, time_chunk=None):
    """
    decoder_input : int32 [B, T]   token ids
    hidden        : (h0, c0) each float32 [1, B, H]   (PyTorch nn.LSTM layout)
    returns       : (decoder_output [B, T, H], (h_n [1,B,H], c_n [1,B,H]))
    """
    emb_table = params["embedding"]
    w_ih, w_hh = params["w_ih"], params["w_hh"]          # [4H, E], [4H, H]
    b_ih, b_hh = params["b_ih"], params["b_hh"]          # [4H], [4H]

    B, T = decoder_input.shape
    E = emb_table.shape[1]
    H = w_hh.shape[1]
    Bp = max(8, ((B + 7) // 8) * 8)                      # pad batch to sublanes

    # Lane-dense output packing factor.
    P = 128 // H if (H < 128 and 128 % H == 0) else 1

    # Time-chunk size: multiple of P, bounded so (x + xw scratch + out), double
    # buffered, stays well inside the scoped-VMEM budget on every generation.
    if time_chunk is None:
        per_step_bytes = 4 * Bp * (2 * E + 10 * H)
        time_chunk = max(P, min(256, (4 * 1024 * 1024) // max(per_step_bytes, 1)))
    Tt = max(P, (time_chunk // P) * P)
    Tt = min(Tt, ((T + P - 1) // P) * P)
    T_pad = ((T + Tt - 1) // Tt) * Tt
    nT = T_pad // Tt
    G = Tt // P

    Bt = Bp            # one batch block; set Bt = Bp//2 (multiple of 8) to split
    nB = Bp // Bt      # across the two v7x TensorCores when Bp >= 16.

    # Embedding lookup (plain JAX gather) directly in time-major layout.
    x_tm = emb_table[decoder_input.T].astype(jnp.float32)       # [T, B, E]
    x_tm = jnp.pad(x_tm, ((0, T_pad - T), (0, Bp - B), (0, 0)))

    # Split + reorder weights: gate blocks (i, f, g, o) -> (i, f, o, g).
    def reorder(w):                                       # w: [4H, X]
        wi, wf, wg, wo = jnp.split(w, 4, axis=0)
        return jnp.concatenate([wi, wf, wo, wg], axis=0)

    wx = reorder(w_ih).T                                  # [E, 4H]
    wh = reorder(w_hh).T                                  # [H, 4H]
    bias = b_ih + b_hh
    bi, bf, bg, bo = jnp.split(bias, 4)
    b_fused = jnp.concatenate([bi, bf, bo, bg]).reshape(1, 4 * H)

    h0 = jnp.pad(hidden[0][0], ((0, Bp - B), (0, 0)))     # [Bp, H]
    c0 = jnp.pad(hidden[1][0], ((0, Bp - B), (0, 0)))

    # Explicit scoped-VMEM limit (v5e default is only 16 MiB, v6e 32 MiB).
    vmem_need = 4 * (2 * Tt * Bt * E          # x chunk, double buffered
                     + 2 * Tt * Bt * 4 * H    # xw scratch + matmul intermediate
                     + 2 * Tt * Bt * H        # packed out chunk, double buffered
                     + 2 * (E + H + 1) * 4 * H
                     + 8 * Bt * H)
    vmem_limit = int(min(max(2 * vmem_need, 16 * 1024 * 1024), 64 * 1024 * 1024))

    kernel = functools.partial(lstm_decoder_kernel, seq_len=T)

    out_packed, h_n, c_n = pl.pallas_call(
        kernel,
        out_shape=(
            jax.ShapeDtypeStruct((T_pad // P, Bp, P * H), jnp.float32),
            jax.ShapeDtypeStruct((Bp, H), jnp.float32),
            jax.ShapeDtypeStruct((Bp, H), jnp.float32),
        ),
        grid=(nB, nT),
        in_specs=[
            pl.BlockSpec((Tt, Bt, E), lambda b, i: (i, b, 0)),     # x chunk
            pl.BlockSpec((E, 4 * H), lambda b, i: (0, 0)),         # W_x
            pl.BlockSpec((H, 4 * H), lambda b, i: (0, 0)),         # W_h
            pl.BlockSpec((1, 4 * H), lambda b, i: (0, 0)),         # bias
            pl.BlockSpec((Bt, H), lambda b, i: (b, 0)),            # h0
            pl.BlockSpec((Bt, H), lambda b, i: (b, 0)),            # c0
        ],
        out_specs=(
            pl.BlockSpec((G, Bt, P * H), lambda b, i: (i, b, 0)),  # packed out
            pl.BlockSpec((Bt, H), lambda b, i: (b, 0)),            # h_n
            pl.BlockSpec((Bt, H), lambda b, i: (b, 0)),            # c_n
        ),
        scratch_shapes=[
            pltpu.VMEM((Tt, Bt, 4 * H), jnp.float32),   # hoisted input projection
            pltpu.VMEM((Bt, H), jnp.float32),           # h carry
            pltpu.VMEM((Bt, H), jnp.float32),           # c carry
        ],
        compiler_params=pltpu.CompilerParams(
            dimension_semantics=("parallel", "arbitrary"),
            vmem_limit_bytes=vmem_limit),
    )(x_tm, wx, wh, b_fused, h0, c0)

    # Unpack lane-dense output -> [T, Bp, H], drop padding, go batch_first.
    out_tm = out_packed.reshape(T_pad // P, Bp, P, H)
    out_tm = jnp.transpose(out_tm, (0, 2, 1, 3)).reshape(T_pad, Bp, H)
    decoder_output = jnp.transpose(out_tm[:T, :B, :], (1, 0, 2))   # [B, T, H]
    return decoder_output, (h_n[:B][None], c_n[:B][None])


def _reference_forward(decoder_input, hidden, params):
    """Pure-JAX reference of the same PyTorch semantics (for sanity check)."""
    emb = params["embedding"][decoder_input]              # [B, T, E]
    w_ih, w_hh = params["w_ih"], params["w_hh"]
    bias = params["b_ih"] + params["b_hh"]
    H = w_hh.shape[1]
    h, c = hidden[0][0], hidden[1][0]

    def step(carry, x_t):
        h, c = carry
        gates = x_t @ w_ih.T + h @ w_hh.T + bias
        i = jax.nn.sigmoid(gates[:, 0 * H:1 * H])
        f = jax.nn.sigmoid(gates[:, 1 * H:2 * H])
        g = jnp.tanh(gates[:, 2 * H:3 * H])
        o = jax.nn.sigmoid(gates[:, 3 * H:4 * H])
        c = f * c + i * g
        h = o * jnp.tanh(c)
        return (h, c), h

    (h_n, c_n), outs = jax.lax.scan(step, (h, c), jnp.transpose(emb, (1, 0, 2)))
    return jnp.transpose(outs, (1, 0, 2)), (h_n[None], c_n[None])


if __name__ == "__main__":
    # Small shapes consistent with the module's forward.
    B, T = 2, 8                  # batch, sequence length
    E, H = 16, 32                # dim_decoder_embedding, dim_decoder_hidden
    VOCAB = 50                   # target_corpus_len

    key = jax.random.PRNGKey(0)
    k_emb, k_wih, k_whh, k_bih, k_bhh, k_tok, k_h0, k_c0 = jax.random.split(key, 8)

    params = {
        "embedding": jax.random.normal(k_emb, (VOCAB, E), jnp.float32) * 0.1,
        "w_ih": jax.random.normal(k_wih, (4 * H, E), jnp.float32) * 0.1,
        "w_hh": jax.random.normal(k_whh, (4 * H, H), jnp.float32) * 0.1,
        "b_ih": jax.random.normal(k_bih, (4 * H,), jnp.float32) * 0.1,
        "b_hh": jax.random.normal(k_bhh, (4 * H,), jnp.float32) * 0.1,
    }

    decoder_input = jax.random.randint(k_tok, (B, T), 0, VOCAB, jnp.int32)
    hidden = (jax.random.normal(k_h0, (1, B, H), jnp.float32),
              jax.random.normal(k_c0, (1, B, H), jnp.float32))

    # Chunked run (2 time-chunks of 4 steps -> exercises the carried-state grid).
    out, (h_n, c_n) = decoder_forward(decoder_input, hidden, params, time_chunk=4)
    jax.block_until_ready((out, h_n, c_n))

    ref_out, (ref_h, ref_c) = _reference_forward(decoder_input, hidden, params)
    assert out.shape == (B, T, H) and h_n.shape == (1, B, H) and c_n.shape == (1, B, H)
    assert jnp.allclose(out, ref_out, atol=1e-5)
    assert jnp.allclose(h_n, ref_h, atol=1e-5)
    assert jnp.allclose(c_n, ref_c, atol=1e-5)

    # Second check: T not a multiple of the chunk (exercises padded-tail masking).
    T2 = 6
    ids2 = jax.random.randint(jax.random.PRNGKey(1), (B, T2), 0, VOCAB, jnp.int32)
    out2, (h2, c2) = decoder_forward(ids2, hidden, params, time_chunk=4)
    jax.block_until_ready((out2, h2, c2))
    ref_out2, (ref_h2, ref_c2) = _reference_forward(ids2, hidden, params)
    assert jnp.allclose(out2, ref_out2, atol=1e-5)
    assert jnp.allclose(h2, ref_h2, atol=1e-5)
    assert jnp.allclose(c2, ref_c2, atol=1e-5)

    print("KERNEL_OK")
</pallas_src>

<mosaic_0001>
module attributes {stable_mosaic.version = 11 : i64} {
  func.func @lstm_decoder_kernel(%arg0: i32, %arg1: i32, %arg2: memref<4x8x16xf32, #tpu.memory_space<vmem>>, %arg3: memref<16x128xf32, #tpu.memory_space<vmem>>, %arg4: memref<32x128xf32, #tpu.memory_space<vmem>>, %arg5: memref<1x128xf32, #tpu.memory_space<vmem>>, %arg6: memref<8x32xf32, #tpu.memory_space<vmem>>, %arg7: memref<8x32xf32, #tpu.memory_space<vmem>>, %arg8: memref<1x8x128xf32, #tpu.memory_space<vmem>>, %arg9: memref<8x32xf32, #tpu.memory_space<vmem>>, %arg10: memref<8x32xf32, #tpu.memory_space<vmem>>, %arg11: memref<4x8x128xf32, #tpu.memory_space<vmem>>, %arg12: memref<8x32xf32, #tpu.memory_space<vmem>>, %arg13: memref<8x32xf32, #tpu.memory_space<vmem>>) attributes {dimension_semantics = [#tpu.dimension_semantics<parallel>, #tpu.dimension_semantics<arbitrary>], iteration_bounds = array<i64: 1, 2>, scalar_prefetch = 0 : i64, scratch_operands = 3 : i64, tpu.core_type = #tpu.core_type<tc>, window_params = [{transform_indices = @transform_0, window_bounds = array<i64: 4, 8, 16>}, {pipeline_mode = #tpu.pipeline_mode<synchronous>, transform_indices = @transform_1, window_bounds = array<i64: 16, 128>}, {pipeline_mode = #tpu.pipeline_mode<synchronous>, transform_indices = @transform_2, window_bounds = array<i64: 32, 128>}, {pipeline_mode = #tpu.pipeline_mode<synchronous>, transform_indices = @transform_3, window_bounds = array<i64: 1, 128>}, {transform_indices = @transform_4, window_bounds = array<i64: 8, 32>}, {transform_indices = @transform_5, window_bounds = array<i64: 8, 32>}, {transform_indices = @transform_6, window_bounds = array<i64: 1, 8, 128>}, {transform_indices = @transform_7, window_bounds = array<i64: 8, 32>}, {transform_indices = @transform_8, window_bounds = array<i64: 8, 32>}]} {
    %c0_i32 = arith.constant 0 : i32
    %0 = arith.cmpi eq, %arg1, %c0_i32 : i32
    %1 = arith.extui %0 : i1 to i32
    %c0_i32_0 = arith.constant 0 : i32
    %2 = arith.cmpi ne, %1, %c0_i32_0 : i32
    scf.if %2 {
      %c0_48 = arith.constant 0 : index
      %c0_49 = arith.constant 0 : index
      %116 = vector.load %arg6[%c0_48, %c0_49] : memref<8x32xf32, #tpu.memory_space<vmem>>, vector<8x32xf32>
      %c0_50 = arith.constant 0 : index
      %c0_51 = arith.constant 0 : index
      %117 = vector.load %arg12[%c0_50, %c0_51] : memref<8x32xf32, #tpu.memory_space<vmem>>, vector<8x32xf32>
      tpu.vector_store %arg12[%c0_50, %c0_51], %116 {strides = array<i32>} : memref<8x32xf32, #tpu.memory_space<vmem>>, vector<8x32xf32>,
      %c0_52 = arith.constant 0 : index
      %c0_53 = arith.constant 0 : index
      %118 = vector.load %arg7[%c0_52, %c0_53] : memref<8x32xf32, #tpu.memory_space<vmem>>, vector<8x32xf32>
      %c0_54 = arith.constant 0 : index
      %c0_55 = arith.constant 0 : index
      %119 = vector.load %arg13[%c0_54, %c0_55] : memref<8x32xf32, #tpu.memory_space<vmem>>, vector<8x32xf32>
      tpu.vector_store %arg13[%c0_54, %c0_55], %118 {strides = array<i32>} : memref<8x32xf32, #tpu.memory_space<vmem>>, vector<8x32xf32>,
    } else {
    }
    %c0 = arith.constant 0 : index
    %c0_1 = arith.constant 0 : index
    %c0_2 = arith.constant 0 : index
    %3 = vector.load %arg2[%c0, %c0_1, %c0_2] : memref<4x8x16xf32, #tpu.memory_space<vmem>>, vector<4x8x16xf32>
    %4 = vector.shape_cast %3 : vector<4x8x16xf32> to vector<32x16xf32>
    %c0_3 = arith.constant 0 : index
    %c0_4 = arith.constant 0 : index
    %5 = vector.load %arg3[%c0_3, %c0_4] : memref<16x128xf32, #tpu.memory_space<vmem>>, vector<16x128xf32>
    %cst = arith.constant dense<0.000000e+00> : vector<32x128xf32>
    %6 = tpu.matmul %4, %5, %cst {dimension_numbers = #tpu.dot_dimension_numbers<[1], [0], [0], [1], [0, 0, 1, 1], [], []>} : vector<32x16xf32>, vector<16x128xf32>, vector<32x128xf32> -> vector<32x128xf32>
    %c0_5 = arith.constant 0 : index
    %c0_6 = arith.constant 0 : index
    %7 = vector.load %arg5[%c0_5, %c0_6] : memref<1x128xf32, #tpu.memory_space<vmem>>, vector<1x128xf32>
    %8 = vector.broadcast %7 : vector<1x128xf32> to vector<32x128xf32>
    %9 = arith.addf %6, %8 : vector<32x128xf32>
    %10 = vector.shape_cast %9 : vector<32x128xf32> to vector<4x8x128xf32>
    %c0_7 = arith.constant 0 : index
    %c0_8 = arith.constant 0 : index
    %c0_9 = arith.constant 0 : index
    %11 = vector.load %arg11[%c0_7, %c0_8, %c0_9] : memref<4x8x128xf32, #tpu.memory_space<vmem>>, vector<4x8x128xf32>
    tpu.vector_store %arg11[%c0_7, %c0_8, %c0_9], %10 {strides = array<i32>} : memref<4x8x128xf32, #tpu.memory_space<vmem>>, vector<4x8x128xf32>,
    %c0_10 = arith.constant 0 : index
    %c0_11 = arith.constant 0 : index
    %12 = vector.load %arg4[%c0_10, %c0_11] : memref<32x128xf32, #tpu.memory_space<vmem>>, vector<32x128xf32>
    %c0_12 = arith.constant 0 : index
    %c0_13 = arith.constant 0 : index
    %13 = vector.load %arg12[%c0_12, %c0_13] : memref<8x32xf32, #tpu.memory_space<vmem>>, vector<8x32xf32>
    %c0_14 = arith.constant 0 : index
    %c0_15 = arith.constant 0 : index
    %14 = vector.load %arg13[%c0_14, %c0_15] : memref<8x32xf32, #tpu.memory_space<vmem>>, vector<8x32xf32>
    %c0_i32_16 = arith.constant 0 : i32
    %c4_i32 = arith.constant 4 : i32
    %15 = arith.muli %c0_i32_16, %c4_i32 : i32
    %c0_i32_17 = arith.constant 0 : i32
    %16 = arith.addi %15, %c0_i32_17 : i32
    %17 = arith.index_cast %16 : i32 to index
    %c0_18 = arith.constant 0 : index
    %c0_19 = arith.constant 0 : index
    %18 = vector.load %arg11[%17, %c0_18, %c0_19] : memref<4x8x128xf32, #tpu.memory_space<vmem>>, vector<1x8x128xf32>
    %19 = vector.shape_cast %18 : vector<1x8x128xf32> to vector<8x128xf32>
    %cst_20 = arith.constant dense<0.000000e+00> : vector<8x128xf32>
    %20 = tpu.matmul %13, %12, %cst_20 {dimension_numbers = #tpu.dot_dimension_numbers<[1], [0], [0], [1], [0, 0, 1, 1], [], []>} : vector<8x32xf32>, vector<32x128xf32>, vector<8x128xf32> -> vector<8x128xf32>
    %21 = arith.addf %19, %20 : vector<8x128xf32>
    %22 = vector.extract_strided_slice %21 {offsets = [0, 0], sizes = [8, 96], strides = [1, 1]} : vector<8x128xf32> to vector<8x96xf32>
    %23 = arith.negf %22 : vector<8x96xf32>
    %24 = math.exp %23 : vector<8x96xf32>
    %cst_21 = arith.constant 1.000000e+00 : f32
    %25 = vector.broadcast %cst_21 : f32 to vector<8x96xf32>
    %26 = arith.addf %25, %24 : vector<8x96xf32>
    %27 = arith.divf %25, %26 : vector<8x96xf32>
    %28 = vector.extract_strided_slice %21 {offsets = [0, 96], sizes = [8, 32], strides = [1, 1]} : vector<8x128xf32> to vector<8x32xf32>
    %29 = math.tanh %28 : vector<8x32xf32>
    %30 = vector.extract_strided_slice %27 {offsets = [0, 0], sizes = [8, 32], strides = [1, 1]} : vector<8x96xf32> to vector<8x32xf32>
    %31 = vector.extract_strided_slice %27 {offsets = [0, 32], sizes = [8, 32], strides = [1, 1]} : vector<8x96xf32> to vector<8x32xf32>
    %32 = vector.extract_strided_slice %27 {offsets = [0, 64], sizes = [8, 32], strides = [1, 1]} : vector<8x96xf32> to vector<8x32xf32>
    %33 = arith.mulf %31, %14 : vector<8x32xf32>
    %34 = arith.mulf %30, %29 : vector<8x32xf32>
    %35 = arith.addf %33, %34 : vector<8x32xf32>
    %36 = math.tanh %35 : vector<8x32xf32>
    %37 = arith.mulf %32, %36 : vector<8x32xf32>
    %c4_i32_22 = arith.constant 4 : i32
    %38 = arith.muli %c0_i32_16, %c4_i32_22 : i32
    %c1_i32 = arith.constant 1 : i32
    %39 = arith.addi %38, %c1_i32 : i32
    %40 = arith.index_cast %39 : i32 to index
    %c0_23 = arith.constant 0 : index
    %c0_24 = arith.constant 0 : index
    %41 = vector.load %arg11[%40, %c0_23, %c0_24] : memref<4x8x128xf32, #tpu.memory_space<vmem>>, vector<1x8x128xf32>
    %42 = vector.shape_cast %41 : vector<1x8x128xf32> to vector<8x128xf32>
    %cst_25 = arith.constant dense<0.000000e+00> : vector<8x128xf32>
    %43 = tpu.matmul %37, %12, %cst_25 {dimension_numbers = #tpu.dot_dimension_numbers<[1], [0], [0], [1], [0, 0, 1, 1], [], []>} : vector<8x32xf32>, vector<32x128xf32>, vector<8x128xf32> -> vector<8x128xf32>
    %44 = arith.addf %42, %43 : vector<8x128xf32>
    %45 = vector.extract_strided_slice %44 {offsets = [0, 0], sizes = [8, 96], strides = [1, 1]} : vector<8x128xf32> to vector<8x96xf32>
    %46 = arith.negf %45 : vector<8x96xf32>
    %47 = math.exp %46 : vector<8x96xf32>
    %cst_26 = arith.constant 1.000000e+00 : f32
    %48 = vector.broadcast %cst_26 : f32 to vector<8x96xf32>
    %49 = arith.addf %48, %47 : vector<8x96xf32>
    %50 = arith.divf %48, %49 : vector<8x96xf32>
    %51 = vector.extract_strided_slice %44 {offsets = [0, 96], sizes = [8, 32], strides = [1, 1]} : vector<8x128xf32> to vector<8x32xf32>
    %52 = math.tanh %51 : vector<8x32xf32>
    %53 = vector.extract_strided_slice %50 {offsets = [0, 0], sizes = [8, 32], strides = [1, 1]} : vector<8x96xf32> to vector<8x32xf32>
    %54 = vector.extract_strided_slice %50 {offsets = [0, 32], sizes = [8, 32], strides = [1, 1]} : vector<8x96xf32> to vector<8x32xf32>
    %55 = vector.extract_strided_slice %50 {offsets = [0, 64], sizes = [8, 32], strides = [1, 1]} : vector<8x96xf32> to vector<8x32xf32>
    %56 = arith.mulf %54, %35 : vector<8x32xf32>
    %57 = arith.mulf %53, %52 : vector<8x32xf32>
    %58 = arith.addf %56, %57 : vector<8x32xf32>
    %59 = math.tanh %58 : vector<8x32xf32>
    %60 = arith.mulf %55, %59 : vector<8x32xf32>
    %c4_i32_27 = arith.constant 4 : i32
    %61 = arith.muli %c0_i32_16, %c4_i32_27 : i32
    %c2_i32 = arith.constant 2 : i32
    %62 = arith.addi %61, %c2_i32 : i32
    %63 = arith.index_cast %62 : i32 to index
    %c0_28 = arith.constant 0 : index
    %c0_29 = arith.constant 0 : index
    %64 = vector.load %arg11[%63, %c0_28, %c0_29] : memref<4x8x128xf32, #tpu.memory_space<vmem>>, vector<1x8x128xf32>
    %65 = vector.shape_cast %64 : vector<1x8x128xf32> to vector<8x128xf32>
    %cst_30 = arith.constant dense<0.000000e+00> : vector<8x128xf32>
    %66 = tpu.matmul %60, %12, %cst_30 {dimension_numbers = #tpu.dot_dimension_numbers<[1], [0], [0], [1], [0, 0, 1, 1], [], []>} : vector<8x32xf32>, vector<32x128xf32>, vector<8x128xf32> -> vector<8x128xf32>
    %67 = arith.addf %65, %66 : vector<8x128xf32>
    %68 = vector.extract_strided_slice %67 {offsets = [0, 0], sizes = [8, 96], strides = [1, 1]} : vector<8x128xf32> to vector<8x96xf32>
    %69 = arith.negf %68 : vector<8x96xf32>
    %70 = math.exp %69 : vector<8x96xf32>
    %cst_31 = arith.constant 1.000000e+00 : f32
    %71 = vector.broadcast %cst_31 : f32 to vector<8x96xf32>
    %72 = arith.addf %71, %70 : vector<8x96xf32>
    %73 = arith.divf %71, %72 : vector<8x96xf32>
    %74 = vector.extract_strided_slice %67 {offsets = [0, 96], sizes = [8, 32], strides = [1, 1]} : vector<8x128xf32> to vector<8x32xf32>
    %75 = math.tanh %74 : vector<8x32xf32>
    %76 = vector.extract_strided_slice %73 {offsets = [0, 0], sizes = [8, 32], strides = [1, 1]} : vector<8x96xf32> to vector<8x32xf32>
    %77 = vector.extract_strided_slice %73 {offsets = [0, 32], sizes = [8, 32], strides = [1, 1]} : vector<8x96xf32> to vector<8x32xf32>
    %78 = vector.extract_strided_slice %73 {offsets = [0, 64], sizes = [8, 32], strides = [1, 1]} : vector<8x96xf32> to vector<8x32xf32>
    %79 = arith.mulf %77, %58 : vector<8x32xf32>
    %80 = arith.mulf %76, %75 : vector<8x32xf32>
    %81 = arith.addf %79, %80 : vector<8x32xf32>
    %82 = math.tanh %81 : vector<8x32xf32>
    %83 = arith.mulf %78, %82 : vector<8x32xf32>
    %c4_i32_32 = arith.constant 4 : i32
    %84 = arith.muli %c0_i32_16, %c4_i32_32 : i32
    %c3_i32 = arith.constant 3 : i32
    %85 = arith.addi %84, %c3_i32 : i32
    %86 = arith.index_cast %85 : i32 to index
    %c0_33 = arith.constant 0 : index
    %c0_34 = arith.constant 0 : index
    %87 = vector.load %arg11[%86, %c0_33, %c0_34] : memref<4x8x128xf32, #tpu.memory_space<vmem>>, vector<1x8x128xf32>
    %88 = vector.shape_cast %87 : vector<1x8x128xf32> to vector<8x128xf32>
    %cst_35 = arith.constant dense<0.000000e+00> : vector<8x128xf32>
    %89 = tpu.matmul %83, %12, %cst_35 {dimension_numbers = #tpu.dot_dimension_numbers<[1], [0], [0], [1], [0, 0, 1, 1], [], []>} : vector<8x32xf32>, vector<32x128xf32>, vector<8x128xf32> -> vector<8x128xf32>
    %90 = arith.addf %88, %89 : vector<8x128xf32>
    %91 = vector.extract_strided_slice %90 {offsets = [0, 0], sizes = [8, 96], strides = [1, 1]} : vector<8x128xf32> to vector<8x96xf32>
    %92 = arith.negf %91 : vector<8x96xf32>
    %93 = math.exp %92 : vector<8x96xf32>
    %cst_36 = arith.constant 1.000000e+00 : f32
    %94 = vector.broadcast %cst_36 : f32 to vector<8x96xf32>
    %95 = arith.addf %94, %93 : vector<8x96xf32>
    %96 = arith.divf %94, %95 : vector<8x96xf32>
    %97 = vector.extract_strided_slice %90 {offsets = [0, 96], sizes = [8, 32], strides = [1, 1]} : vector<8x128xf32> to vector<8x32xf32>
    %98 = math.tanh %97 : vector<8x32xf32>
    %99 = vector.extract_strided_slice %96 {offsets = [0, 0], sizes = [8, 32], strides = [1, 1]} : vector<8x96xf32> to vector<8x32xf32>
    %100 = vector.extract_strided_slice %96 {offsets = [0, 32], sizes = [8, 32], strides = [1, 1]} : vector<8x96xf32> to vector<8x32xf32>
    %101 = vector.extract_strided_slice %96 {offsets = [0, 64], sizes = [8, 32], strides = [1, 1]} : vector<8x96xf32> to vector<8x32xf32>
    %102 = arith.mulf %100, %81 : vector<8x32xf32>
    %103 = arith.mulf %99, %98 : vector<8x32xf32>
    %104 = arith.addf %102, %103 : vector<8x32xf32>
    %105 = math.tanh %104 : vector<8x32xf32>
    %106 = arith.mulf %101, %105 : vector<8x32xf32>
    %107 = tpu.concatenate %37, %60, %83, %106 in 1 : vector<8x32xf32>, vector<8x32xf32>, vector<8x32xf32>, vector<8x32xf32> -> vector<8x128xf32>
    %108 = arith.index_cast %c0_i32_16 : i32 to index
    %c0_37 = arith.constant 0 : index
    %c0_38 = arith.constant 0 : index
    %109 = vector.load %arg8[%108, %c0_37, %c0_38] : memref<1x8x128xf32, #tpu.memory_space<vmem>>, vector<1x8x128xf32>
    %110 = vector.shape_cast %109 : vector<1x8x128xf32> to vector<8x128xf32>
    %111 = vector.shape_cast %107 : vector<8x128xf32> to vector<1x8x128xf32>
    tpu.vector_store %arg8[%108, %c0_37, %c0_38], %111 {strides = array<i32>} : memref<1x8x128xf32, #tpu.memory_space<vmem>>, vector<1x8x128xf32>,
    %c1_i32_39 = arith.constant 1 : i32
    %c0_40 = arith.constant 0 : index
    %c0_41 = arith.constant 0 : index
    %112 = vector.load %arg12[%c0_40, %c0_41] : memref<8x32xf32, #tpu.memory_space<vmem>>, vector<8x32xf32>
    tpu.vector_store %arg12[%c0_40, %c0_41], %106 {strides = array<i32>} : memref<8x32xf32, #tpu.memory_space<vmem>>, vector<8x32xf32>,
    %c0_42 = arith.constant 0 : index
    %c0_43 = arith.constant 0 : index
    %113 = vector.load %arg13[%c0_42, %c0_43] : memref<8x32xf32, #tpu.memory_space<vmem>>, vector<8x32xf32>
    tpu.vector_store %arg13[%c0_42, %c0_43], %104 {strides = array<i32>} : memref<8x32xf32, #tpu.memory_space<vmem>>, vector<8x32xf32>,
    %c0_44 = arith.constant 0 : index
    %c0_45 = arith.constant 0 : index
    %114 = vector.load %arg9[%c0_44, %c0_45] : memref<8x32xf32, #tpu.memory_space<vmem>>, vector<8x32xf32>
    tpu.vector_store %arg9[%c0_44, %c0_45], %106 {strides = array<i32>} : memref<8x32xf32, #tpu.memory_space<vmem>>, vector<8x32xf32>,
    %c0_46 = arith.constant 0 : index
    %c0_47 = arith.constant 0 : index
    %115 = vector.load %arg10[%c0_46, %c0_47] : memref<8x32xf32, #tpu.memory_space<vmem>>, vector<8x32xf32>
    tpu.vector_store %arg10[%c0_46, %c0_47], %104 {strides = array<i32>} : memref<8x32xf32, #tpu.memory_space<vmem>>, vector<8x32xf32>,
    return
  }
  func.func @transform_0(%arg0: i32, %arg1: i32) -> (i32, i32, i32) {
    %c0_i32 = arith.constant 0 : i32
    %c0_i32_0 = arith.constant 0 : i32
    return %arg1, %arg0, %c0_i32 : i32, i32, i32
  }
  func.func @transform_1(%arg0: i32, %arg1: i32) -> (i32, i32) {
    %c0_i32 = arith.constant 0 : i32
    %c0_i32_0 = arith.constant 0 : i32
    %c0_i32_1 = arith.constant 0 : i32
    return %c0_i32, %c0_i32_0 : i32, i32
  }
  func.func @transform_2(%arg0: i32, %arg1: i32) -> (i32, i32) {
    %c0_i32 = arith.constant 0 : i32
    %c0_i32_0 = arith.constant 0 : i32
    %c0_i32_1 = arith.constant 0 : i32
    return %c0_i32, %c0_i32_0 : i32, i32
  }
  func.func @transform_3(%arg0: i32, %arg1: i32) -> (i32, i32) {
    %c0_i32 = arith.constant 0 : i32
    %c0_i32_0 = arith.constant 0 : i32
    %c0_i32_1 = arith.constant 0 : i32
    return %c0_i32, %c0_i32_0 : i32, i32
  }
  func.func @transform_4(%arg0: i32, %arg1: i32) -> (i32, i32) {
    %c0_i32 = arith.constant 0 : i32
    %c0_i32_0 = arith.constant 0 : i32
    return %arg0, %c0_i32 : i32, i32
  }
  func.func @transform_5(%arg0: i32, %arg1: i32) -> (i32, i32) {
    %c0_i32 = arith.constant 0 : i32
    %c0_i32_0 = arith.constant 0 : i32
    return %arg0, %c0_i32 : i32, i32
  }
  func.func @transform_6(%arg0: i32, %arg1: i32) -> (i32, i32, i32) {
    %c0_i32 = arith.constant 0 : i32
    %c0_i32_0 = arith.constant 0 : i32
    return %arg1, %arg0, %c0_i32 : i32, i32, i32
  }
  func.func @transform_7(%arg0: i32, %arg1: i32) -> (i32, i32) {
    %c0_i32 = arith.constant 0 : i32
    %c0_i32_0 = arith.constant 0 : i32
    return %arg0, %c0_i32 : i32, i32
  }
  func.func @transform_8(%arg0: i32, %arg1: i32) -> (i32, i32) {
    %c0_i32 = arith.constant 0 : i32
    %c0_i32_0 = arith.constant 0 : i32
    return %arg0, %c0_i32 : i32, i32
  }
}

</mosaic_0001>

<llo_original>
// kernel: tpu_custom_call.1
$region0: #{tpu_custom_call.1}
  #allocation0 [shape = 'u32[]', space=smem, size = 0x4, offset = 0x4, fixed_abs, tag = 'smem constant byte address 0x4 - core index']
  #allocation1 [shape = 'u32[144,128]{1,0:T(1,128)}', space=vmem, size = 0x12000, scoped, tag = 'internal scratch']
  #allocation2 [shape = 'f32[4,8,128]{2,1,0:T(8,128)}', space=vmem, size = 0x4000, scoped, tag = 'scratch operand']
  #allocation3 [shape = 'f32[8,32]{1,0:T(8,128)}', space=vmem, size = 0x1000, scoped, tag = 'scratch operand']
  #allocation4 [shape = 'f32[8,32]{1,0:T(8,128)}', space=vmem, size = 0x1000, scoped, tag = 'scratch operand']
  %s0 = inlined_call_operand.hbm [shape: f32[8,8,16], index: 0, kind: input, shape index: {}]
  %s1 = inlined_call_operand.hbm [shape: f32[16,128], index: 1, kind: input, shape index: {}]
  %s2 = inlined_call_operand.hbm [shape: f32[32,128], index: 2, kind: input, shape index: {}]
  %s3 = inlined_call_operand.vmem [shape: f32[1,128], index: 3, kind: input, shape index: {}]
  %s4 = inlined_call_operand.vmem [shape: f32[8,32], index: 4, kind: input, shape index: {}]
  %s5 = inlined_call_operand.vmem [shape: f32[8,32], index: 5, kind: input, shape index: {}]
  %s6 = inlined_call_operand.hbm [shape: f32[2,8,128], index: 6, kind: output, shape index: {0}]
  %s7 = inlined_call_operand.hbm [shape: f32[8,32], index: 7, kind: output, shape index: {1}]
  %s8 = inlined_call_operand.hbm [shape: f32[8,32], index: 8, kind: output, shape index: {2}]
  %9 = xla_tuple %s6, %s7, %s8
  %s10 = sld [smem:[#allocation0]]
  $region89: #{tpu_custom_call.1} parent=0
    _
  %s12 = ssub.s32 1, %s10
  %s13 = scalar_select 0, %s12, %s10
  $region1: #{tpu_custom_call.1} parent=0
    #allocation5 [shape = 'u8[32768]{0}', space=vmem, size = 0x8000, scoped, tag = 'input window, operand 0']
    #allocation6 [shape = 's32[2]{0}', space=sflag, size = 0x8, scoped, tag = 'scoped memory for tpu_custom_call.1']
    #allocation7 [shape = 's32[2]{0}', space=sflag, size = 0x8, scoped, tag = 'scoped memory for tpu_custom_call.1']
    #allocation8 [shape = 'u8[8192]{0}', space=vmem, size = 0x2000, scoped, tag = 'input window, operand 1, single buffered']
    #allocation9 [shape = 's32[1]{0}', space=sflag, size = 0x4, scoped, tag = 'scoped memory for tpu_custom_call.1']
    #allocation10 [shape = 'u8[16384]{0}', space=vmem, size = 0x4000, scoped, tag = 'input window, operand 2, single buffered']
    #allocation11 [shape = 'u8[8192]{0}', space=vmem, size = 0x2000, scoped, tag = 'output window, operand 0']
    #allocation12 [shape = 'u8[4096]{0}', space=vmem, size = 0x1000, scoped, tag = 'output window, operand 1, single buffered']
    #allocation13 [shape = 's32[1]{0}', space=sflag, size = 0x4, scoped, tag = 'scoped memory for tpu_custom_call.1']
    #allocation14 [shape = 'u8[4096]{0}', space=vmem, size = 0x1000, scoped, tag = 'output window, operand 2, single buffered']
    %14 = vsyncpa [#allocation6], 0
    %s15 = scalar_lea.sflag [#allocation6], 1
    %16 = vsyncpa %s15, 0
    %17 = vsyncpa [#allocation9], 0
    %18 = vsyncpa [#allocation7], 0
    %s19 = scalar_lea.sflag [#allocation7], 1
    %20 = vsyncpa %s19, 0
    %21 = vsyncpa [#allocation13], 0
    loop: start=0, step=1, limit=4
    $region2: #{tpu_custom_call.1} parent=1 // loop_pre_header
      _
    $region3: #{tpu_custom_call.1} parent=1 // loop_header
      %s23 = sphi 0, %s27
      %p24 = scmp.ge.s32.totalorder %s23, 4
      %s30 = sphi 0, %s42
      %s31 = sphi 0, %s38
      %s32 = sphi 0, %s30
      %s33 = sphi 0, %s31
      %s34 = sphi 0, %s32
      %s35 = sphi 0, %s33
      %s47 = sphi 0, %s49
      %s50 = sphi 0, %s47
      %s51 = sphi 0, %s50
      %s67 = sphi 0, %s51
      %s71 = sphi 0, %s71
      %s73 = sphi 0, %s71
      %s74 = sphi 0, %s73
      %s88 = sphi 0, %s74
      %s92 = sphi 0, %s92
      %s94 = sphi 0, %s92
      %s95 = sphi 0, %s94
      %s109 = sphi 0, %s95
      %s113 = sphi 0, %s113
      %s115 = sphi 0, %s113
      %s116 = sphi 0, %s115
      %s130 = sphi 0, %s116
      %s136 = sphi 0, %s138
      %s139 = sphi 0, %s136
      %s140 = sphi 0, %s139
      %s156 = sphi 0, %s140
      %s162 = sphi 0, %s164
      %s165 = sphi 0, %s162
      %s166 = sphi 0, %s165
      %s182 = sphi 0, %s166
      %s190 = sphi 0, %s192
      %s193 = sphi 0, %s190
      %s194 = sphi 0, %s193
      %s210 = sphi 0, %s194
      %s216 = sphi 0, %s218
      %s219 = sphi 0, %s216
      %s220 = sphi 0, %s219
      %s236 = sphi 0, %s220
      %s242 = sphi 0, %s244
      %s245 = sphi 0, %s242
      %s246 = sphi 0, %s245
      %s262 = sphi 0, %s246
    $region4: #{tpu_custom_call.1} parent=1 // loop_header_branch
      %26 = sbr.rel (%p24) target = $region8
    $region5: #{tpu_custom_call.1} parent=1 // loop_body
      %s28 = ssub.s32 %s23, 1
      %s29 = ssub.s32 %s23, 2
      %s36 = sadd.s32 1, %s31
      %p37 = scmp.ge.s32.totalorder %s36, 2
      %s38 = scalar_select %p37, 0, %s36
      %s39 = sadd.s32 1, %s30
      %s40 = scalar_select %p37, %s39, %s30
      %p41 = scmp.ge.s32.totalorder %s40, 1
      %s42 = scalar_select %p41, 0, %s40
      %s43 = ssub.s32 %s31, %s38
      %s44 = ssub.s32 %s30, %s42
      %s45 = sor.u32 %s43, %s44
      %p46 = scmp.eq.s32.totalorder %s45, 0
      %s48 = sadd.s32 %s47, 1
      %s49 = scalar_select %p46, %s47, %s48
      %p52 = pneg %p46
      %p53 = scmp.eq.s32.totalorder %s23, 1
      %p54 = por %p52, %p53
      %p55 = scmp.ne.s32.totalorder %s47, %s50
      %p56 = scmp.eq.s32.totalorder %s23, 0
      %p57 = por %p55, %p56
      %p58 = scmp.ne.s32.totalorder %s47, %s50
      %p59 = scmp.eq.s32.totalorder %s28, 1
      %p60 = por %p58, %p59
      %p61 = scmp.ne.s32.totalorder %s50, %s51
      %p62 = scmp.eq.s32.totalorder %s28, 0
      %p63 = por %p61, %p62
      %p64 = scmp.ne.s32.totalorder %s50, %s51
      %p65 = scmp.eq.s32.totalorder %s29, 1
      %p66 = por %p64, %p65
      %p68 = scmp.ne.s32.totalorder %s51, %s67
      %p69 = scmp.eq.s32.totalorder %s29, 0
      %p70 = por %p68, %p69
      %s72 = sadd.s32 %s71, 1
      %p75 = scmp.eq.s32.totalorder %s23, 1
      %p76 = scmp.ne.s32.totalorder %s71, %s73
      %p77 = scmp.eq.s32.totalorder %s23, 0
      %p78 = por %p76, %p77
      %p79 = scmp.ne.s32.totalorder %s71, %s73
      %p80 = scmp.eq.s32.totalorder %s28, 1
      %p81 = por %p79, %p80
      %p82 = scmp.ne.s32.totalorder %s73, %s74
      %p83 = scmp.eq.s32.totalorder %s28, 0
      %p84 = por %p82, %p83
      %p85 = scmp.ne.s32.totalorder %s73, %s74
      %p86 = scmp.eq.s32.totalorder %s29, 1
      %p87 = por %p85, %p86
      %p89 = scmp.ne.s32.totalorder %s74, %s88
      %p90 = scmp.eq.s32.totalorder %s29, 0
      %p91 = por %p89, %p90
      %s93 = sadd.s32 %s92, 1
      %p96 = scmp.eq.s32.totalorder %s23, 1
      %p97 = scmp.ne.s32.totalorder %s92, %s94
      %p98 = scmp.eq.s32.totalorder %s23, 0
      %p99 = por %p97, %p98
      %p100 = scmp.ne.s32.totalorder %s92, %s94
      %p101 = scmp.eq.s32.totalorder %s28, 1
      %p102 = por %p100, %p101
      %p103 = scmp.ne.s32.totalorder %s94, %s95
      %p104 = scmp.eq.s32.totalorder %s28, 0
      %p105 = por %p103, %p104
      %p106 = scmp.ne.s32.totalorder %s94, %s95
      %p107 = scmp.eq.s32.totalorder %s29, 1
      %p108 = por %p106, %p107
      %p110 = scmp.ne.s32.totalorder %s95, %s109
      %p111 = scmp.eq.s32.totalorder %s29, 0
      %p112 = por %p110, %p111
      %s114 = sadd.s32 %s113, 1
      %p117 = scmp.eq.s32.totalorder %s23, 1
      %p118 = scmp.ne.s32.totalorder %s113, %s115
      %p119 = scmp.eq.s32.totalorder %s23, 0
      %p120 = por %p118, %p119
      %p121 = scmp.ne.s32.totalorder %s113, %s115
      %p122 = scmp.eq.s32.totalorder %s28, 1
      %p123 = por %p121, %p122
      %p124 = scmp.ne.s32.totalorder %s115, %s116
      %p125 = scmp.eq.s32.totalorder %s28, 0
      %p126 = por %p124, %p125
      %p127 = scmp.ne.s32.totalorder %s115, %s116
      %p128 = scmp.eq.s32.totalorder %s29, 1
      %p129 = por %p127, %p128
      %p131 = scmp.ne.s32.totalorder %s116, %s130
      %p132 = scmp.eq.s32.totalorder %s29, 0
      %p133 = por %p131, %p132
      %s134 = ssub.s32 %s30, %s42
      %p135 = scmp.eq.s32.totalorder %s134, 0
      %s137 = sadd.s32 %s136, 1
      %s138 = scalar_select %p135, %s136, %s137
      %p141 = pneg %p135
      %p142 = scmp.eq.s32.totalorder %s23, 1
      %p143 = por %p141, %p142
      %p144 = scmp.ne.s32.totalorder %s136, %s139
      %p145 = scmp.eq.s32.totalorder %s23, 0
      %p146 = por %p144, %p145
      %p147 = scmp.ne.s32.totalorder %s136, %s139
      %p148 = scmp.eq.s32.totalorder %s28, 1
      %p149 = por %p147, %p148
      %p150 = scmp.ne.s32.totalorder %s139, %s140
      %p151 = scmp.eq.s32.totalorder %s28, 0
      %p152 = por %p150, %p151
      %p153 = scmp.ne.s32.totalorder %s139, %s140
      %p154 = scmp.eq.s32.totalorder %s29, 1
      %p155 = por %p153, %p154
      %p157 = scmp.ne.s32.totalorder %s140, %s156
      %p158 = scmp.eq.s32.totalorder %s29, 0
      %p159 = por %p157, %p158
      %s160 = ssub.s32 %s30, %s42
      %p161 = scmp.eq.s32.totalorder %s160, 0
      %s163 = sadd.s32 %s162, 1
      %s164 = scalar_select %p161, %s162, %s163
      %p167 = pneg %p161
      %p168 = scmp.eq.s32.totalorder %s23, 1
      %p169 = por %p167, %p168
      %p170 = scmp.ne.s32.totalorder %s162, %s165
      %p171 = scmp.eq.s32.totalorder %s23, 0
      %p172 = por %p170, %p171
      %p173 = scmp.ne.s32.totalorder %s162, %s165
      %p174 = scmp.eq.s32.totalorder %s28, 1
      %p175 = por %p173, %p174
      %p176 = scmp.ne.s32.totalorder %s165, %s166
      %p177 = scmp.eq.s32.totalorder %s28, 0
      %p178 = por %p176, %p177
      %p179 = scmp.ne.s32.totalorder %s165, %s166
      %p180 = scmp.eq.s32.totalorder %s29, 1
      %p181 = por %p179, %p180
      %p183 = scmp.ne.s32.totalorder %s166, %s182
      %p184 = scmp.eq.s32.totalorder %s29, 0
      %p185 = por %p183, %p184
      %s186 = ssub.s32 %s31, %s38
      %s187 = ssub.s32 %s30, %s42
      %s188 = sor.u32 %s186, %s187
      %p189 = scmp.eq.s32.totalorder %s188, 0
      %s191 = sadd.s32 %s190, 1
      %s192 = scalar_select %p189, %s190, %s191
      %p195 = pneg %p189
      %p196 = scmp.eq.s32.totalorder %s23, 1
      %p197 = por %p195, %p196
      %p198 = scmp.ne.s32.totalorder %s190, %s193
      %p199 = scmp.eq.s32.totalorder %s23, 0
      %p200 = por %p198, %p199
      %p201 = scmp.ne.s32.totalorder %s190, %s193
      %p202 = scmp.eq.s32.totalorder %s28, 1
      %p203 = por %p201, %p202
      %p204 = scmp.ne.s32.totalorder %s193, %s194
      %p205 = scmp.eq.s32.totalorder %s28, 0
      %p206 = por %p204, %p205
      %p207 = scmp.ne.s32.totalorder %s193, %s194
      %p208 = scmp.eq.s32.totalorder %s29, 1
      %p209 = por %p207, %p208
      %p211 = scmp.ne.s32.totalorder %s194, %s210
      %p212 = scmp.eq.s32.totalorder %s29, 0
      %p213 = por %p211, %p212
      %s214 = ssub.s32 %s30, %s42
      %p215 = scmp.eq.s32.totalorder %s214, 0
      %s217 = sadd.s32 %s216, 1
      %s218 = scalar_select %p215, %s216, %s217
      %p221 = pneg %p215
      %p222 = scmp.eq.s32.totalorder %s23, 1
      %p223 = por %p221, %p222
      %p224 = scmp.ne.s32.totalorder %s216, %s219
      %p225 = scmp.eq.s32.totalorder %s23, 0
      %p226 = por %p224, %p225
      %p227 = scmp.ne.s32.totalorder %s216, %s219
      %p228 = scmp.eq.s32.totalorder %s28, 1
      %p229 = por %p227, %p228
      %p230 = scmp.ne.s32.totalorder %s219, %s220
      %p231 = scmp.eq.s32.totalorder %s28, 0
      %p232 = por %p230, %p231
      %p233 = scmp.ne.s32.totalorder %s219, %s220
      %p234 = scmp.eq.s32.totalorder %s29, 1
      %p235 = por %p233, %p234
      %p237 = scmp.ne.s32.totalorder %s220, %s236
      %p238 = scmp.eq.s32.totalorder %s29, 0
      %p239 = por %p237, %p238
      %s240 = ssub.s32 %s30, %s42
      %p241 = scmp.eq.s32.totalorder %s240, 0
      %s243 = sadd.s32 %s242, 1
      %s244 = scalar_select %p241, %s242, %s243
      %p247 = pneg %p241
      %p248 = scmp.eq.s32.totalorder %s23, 1
      %p249 = por %p247, %p248
      %p250 = scmp.ne.s32.totalorder %s242, %s245
      %p251 = scmp.eq.s32.totalorder %s23, 0
      %p252 = por %p250, %p251
      %p253 = scmp.ne.s32.totalorder %s242, %s245
      %p254 = scmp.eq.s32.totalorder %s28, 1
      %p255 = por %p253, %p254
      %p256 = scmp.ne.s32.totalorder %s245, %s246
      %p257 = scmp.eq.s32.totalorder %s28, 0
      %p258 = por %p256, %p257
      %p259 = scmp.ne.s32.totalorder %s245, %s246
      %p260 = scmp.eq.s32.totalorder %s29, 1
      %p261 = por %p259, %p260
      %p263 = scmp.ne.s32.totalorder %s246, %s262
      %p264 = scmp.eq.s32.totalorder %s29, 0
      %p265 = por %p263, %p264
      %p266 = scmp.le.s32.totalorder 1, %s23
      %p267 = scmp.lt.s32.totalorder %s23, 3
      %p268 = pnand %p266, %p267
      %p269 = pneg %p268
      // Predicated region
      $region9: #{tpu_custom_call.1} parent=5 // pred_check
        _
      $region10: #{tpu_custom_call.1} parent=5 // pred_check_branch
        %271 = sbr.rel (%p268) target = $region12
      $region11: #{tpu_custom_call.1} parent=5 // pred_region
        %s272 = ssub.s32 %s23, 1
        // Predicated region
        $region13: #{tpu_custom_call.1} parent=11 // pred_check
          %p273 = pneg %p84
        $region14: #{tpu_custom_call.1} parent=11 // pred_check_branch
          %275 = sbr.rel (%p273) target = $region16
        $region15: #{tpu_custom_call.1} parent=11 // pred_region
          %s277 = ssub.s32 256, 256
          %278 = vsyncadd [#allocation9], %s277
          %s279 = sshll.u32 [#allocation8], 4
          %s280 = int_to_ptr.vmem [resolvable:$true] %s279
          %285 = dma.hbm_to_vmem [thread:$0]  %s1, 256, %s280, [#allocation9], 128, 128, 8
        $region16: #{tpu_custom_call.1} parent=11 // pred_fallthru
          _
        // Predicated region
        $region17: #{tpu_custom_call.1} parent=11 // pred_check
          %p286 = pneg %p105
        $region18: #{tpu_custom_call.1} parent=11 // pred_check_branch
          %288 = sbr.rel (%p286) target = $region20
        $region19: #{tpu_custom_call.1} parent=11 // pred_region
          %s290 = ssub.s32 512, 512
          %291 = vsyncadd [#allocation9], %s290
          %s292 = sshll.u32 [#allocation10], 4
          %s293 = int_to_ptr.vmem [resolvable:$true] %s292
          %298 = dma.hbm_to_vmem [thread:$0]  %s2, 512, %s293, [#allocation9], 128, 128, 8
        $region20: #{tpu_custom_call.1} parent=11 // pred_fallthru
          _
        // Predicated region
        $region21: #{tpu_custom_call.1} parent=11 // pred_check
          %p299 = pneg %p126
        $region22: #{tpu_custom_call.1} parent=11 // pred_check_branch
          %301 = sbr.rel (%p299) target = $region24
        $region23: #{tpu_custom_call.1} parent=11 // pred_region
          _
        $region24: #{tpu_custom_call.1} parent=11 // pred_fallthru
          _
        // Predicated region
        $region25: #{tpu_custom_call.1} parent=11 // pred_check
          %p302 = pneg %p152
        $region26: #{tpu_custom_call.1} parent=11 // pred_check_branch
          %304 = sbr.rel (%p302) target = $region28
        $region27: #{tpu_custom_call.1} parent=11 // pred_region
          %p305 = scmp.lt.s32.totalorder %s32, 0
          %s306 = scalar_select %p305, %s32, 0
          %s307 = smul.addr %s306, 8
          %s308 = scalar_lea.vmem %s4, %s307
        $region28: #{tpu_custom_call.1} parent=11 // pred_fallthru
          _
        // Predicated region
        $region29: #{tpu_custom_call.1} parent=11 // pred_check
          %p309 = pneg %p178
        $region30: #{tpu_custom_call.1} parent=11 // pred_check_branch
          %311 = sbr.rel (%p309) target = $region32
        $region31: #{tpu_custom_call.1} parent=11 // pred_region
          %p312 = scmp.lt.s32.totalorder %s32, 0
          %s313 = scalar_select %p312, %s32, 0
          %s314 = smul.addr %s313, 8
          %s315 = scalar_lea.vmem %s5, %s314
        $region32: #{tpu_custom_call.1} parent=11 // pred_fallthru
          _
      $region12: #{tpu_custom_call.1} parent=5 // pred_fallthru
        _
      %p316 = scmp.lt.s32.totalorder %s23, 2
      // Predicated region
      $region33: #{tpu_custom_call.1} parent=5 // pred_check
        %p317 = pneg %p316
      $region34: #{tpu_custom_call.1} parent=5 // pred_check_branch
        %319 = sbr.rel (%p317) target = $region36
      $region35: #{tpu_custom_call.1} parent=5 // pred_region
        // Predicated region
        $region37: #{tpu_custom_call.1} parent=35 // pred_check
          %p320 = pneg %p57
        $region38: #{tpu_custom_call.1} parent=35 // pred_check_branch
          %322 = sbr.rel (%p320) target = $region40
        $region39: #{tpu_custom_call.1} parent=35 // pred_region
          %s323 = sand.u32 %s47, 1
          %s324 = scalar_lea.sflag [#allocation6], %s323
          %s325 = sand.u32 %s47, 1
          %s326 = smul.addr %s325, 32
          %s327 = scalar_lea.vmem [#allocation5], %s326
          %s328 = smul.u32 4, %s31
          %s330 = ssub.s32 512, 512
          %331 = vsyncadd %s324, %s330
          %s332 = sadd.s32 %s30, %s328
          %s333 = smul.addr %s332, 128
          %s334 = scalar_lea.hbm %s0, %s333
          %s335 = sshll.u32 %s327, 4
          %s336 = int_to_ptr.vmem [resolvable:$true] %s335
          %341 = dma.hbm_to_vmem [thread:$0]  %s334, 512, %s336, %s324, 128, 128, 8
        $region40: #{tpu_custom_call.1} parent=35 // pred_fallthru
          _
      $region36: #{tpu_custom_call.1} parent=5 // pred_fallthru
        _
      %p342 = scmp.le.s32.totalorder 1, %s23
      %p343 = scmp.lt.s32.totalorder %s23, 3
      %p344 = pnand %p342, %p343
      %p345 = pneg %p344
      // Predicated region
      $region41: #{tpu_custom_call.1} parent=5 // pred_check
        _
      $region42: #{tpu_custom_call.1} parent=5 // pred_check_branch
        %347 = sbr.rel (%p344) target = $region44
      $region43: #{tpu_custom_call.1} parent=5 // pred_region
        %s348 = ssub.s32 %s23, 1
        %s349 = sand.u32 %s50, 1
        %s350 = scalar_lea.sflag [#allocation6], %s349
        %s351 = sand.u32 %s50, 1
        %s352 = smul.addr %s351, 32
        %s353 = scalar_lea.vmem [#allocation5], %s352
        // Predicated region
        $region45: #{tpu_custom_call.1} parent=43 // pred_check
          %p354 = pneg %p63
        $region46: #{tpu_custom_call.1} parent=43 // pred_check_branch
          %356 = sbr.rel (%p354) target = $region48
        $region47: #{tpu_custom_call.1} parent=43 // pred_region
          %357 = dma.done %s350, 512
        $region48: #{tpu_custom_call.1} parent=43 // pred_fallthru
          _
        // Predicated region
        $region49: #{tpu_custom_call.1} parent=43 // pred_check
          %p358 = pneg %p84
        $region50: #{tpu_custom_call.1} parent=43 // pred_check_branch
          %360 = sbr.rel (%p358) target = $region52
        $region51: #{tpu_custom_call.1} parent=43 // pred_region
          %361 = dma.done [#allocation9], 256
        $region52: #{tpu_custom_call.1} parent=43 // pred_fallthru
          _
        // Predicated region
        $region53: #{tpu_custom_call.1} parent=43 // pred_check
          %p362 = pneg %p105
        $region54: #{tpu_custom_call.1} parent=43 // pred_check_branch
          %364 = sbr.rel (%p362) target = $region56
        $region55: #{tpu_custom_call.1} parent=43 // pred_region
          %365 = dma.done [#allocation9], 512
        $region56: #{tpu_custom_call.1} parent=43 // pred_fallthru
          _
        %s366 = sand.u32 %s50, 1
        %s367 = scalar_lea.sflag [#allocation6], %s366
        %s368 = sand.u32 %s50, 1
        %s369 = smul.addr %s368, 32
        %s370 = scalar_lea.vmem [#allocation5], %s369
        %p371 = pneg %p63
        %p372 = pneg %p60
        %p373 = pneg %p84
        %p374 = pneg %p81
        %p375 = pneg %p105
        %p376 = pneg %p102
        %p377 = pneg %p126
        %p378 = pneg %p123
        %p379 = scmp.lt.s32.totalorder %s32, 0
        %s380 = scalar_select %p379, %s32, 0
        %s381 = smul.addr %s380, 8
        %s382 = scalar_lea.vmem %s4, %s381
        %p383 = pneg %p152
        %p384 = pneg %p149
        %p385 = scmp.lt.s32.totalorder %s32, 0
        %s386 = scalar_select %p385, %s32, 0
        %s387 = smul.addr %s386, 8
        %s388 = scalar_lea.vmem %s5, %s387
        %p389 = pneg %p178
        %p390 = pneg %p175
        %p391 = pneg %p206
        %p392 = pneg %p203
        %s393 = sand.u32 %s193, 1
        %s394 = scalar_lea.sflag [#allocation7], %s393
        %s395 = sand.u32 %s193, 1
        %s396 = smul.addr %s395, 8
        %s397 = scalar_lea.vmem [#allocation11], %s396
        %p398 = pneg %p232
        %p399 = pneg %p229
        %p400 = pneg %p258
        %p401 = pneg %p255
        %s402 = smul.u32 4, %s33
        %p403 = scmp.lt.s32.totalorder %s32, 0
        %s404 = scalar_select %p403, %s32, 0
        %s405 = smul.addr %s404, 8
        %s406 = scalar_lea.vmem %s4, %s405
        %p407 = scmp.lt.s32.totalorder %s32, 0
        %s408 = scalar_select %p407, %s32, 0
        %s409 = smul.addr %s408, 8
        %s410 = scalar_lea.vmem %s5, %s409
        %p411 = scmp.eq.s32.totalorder %s33, 0
        // Predicated region
        $region57: #{tpu_custom_call.1} parent=43 // pred_check
          %p412 = pneg %p411
        $region58: #{tpu_custom_call.1} parent=43 // pred_check_branch
          %414 = sbr.rel (%p412) target = $region60
        $region59: #{tpu_custom_call.1} parent=43 // pred_region
          %v415 = vld [vmem:[%s406] sm:$0xff]
          %vm416 = vcmask 261120
          %417 = vst.msk [vmem:[#allocation3] sm:$0xff] %vm416, %v415
          %v418 = vld [vmem:[%s410] sm:$0xff]
          %419 = vst.msk [vmem:[#allocation4] sm:$0xff] %vm416, %v418
        $region60: #{tpu_custom_call.1} parent=43 // pred_fallthru
          _
        %v420 = vld [vmem:[%s353] sm:$0xff]
        %v421 = vld [vmem:[%s353 + $0x8] sm:$0xff]
        %v422 = vld [vmem:[%s353 + $0x10] sm:$0xff]
        %v423 = vld [vmem:[%s353 + $0x18] sm:$0xff]
        %v424 = vld [vmem:[#allocation8] sm:$0xff]
        %v425 = vld [vmem:[#allocation8 + $0x8] sm:$0xff]
        %v426 = vld [vmem:[%s3] sm:$0x1]
        %v428 = vlaneseq
        %v429 = vshrl.u32 %v428, 7
        %v430 = vsub.s32 0, %v429
        %v431 = vrot.slane %v426, %v430
        %vm433 = vcmask 130048
        %v435 = vsel %vm433, %v420, 0
        %v438 = vsel %vm433, %v421, 0
        %v441 = vsel %vm433, %v422, 0
        %v444 = vsel %vm433, %v423, 0
        %446 = vmatprep.subr.mxu0 0.0
        %447 = vmatpush1.msra.mxu0 %v424
        %448 = vmatprep.subr.mxu0 0.0
        %449 = vmatpush1.msra.mxu0 %v425
        %450 = vmatprep.subr.mxu0 0.0
        %451 = vmatpush1.msra.mxu0 0.0
        %452 = vmatprep.subr.mxu0 0.0
        %453 = vmatpush1.msra.mxu0 0.0
        %454 = vmatprep.subr.mxu0 0.0
        %455 = vmatpush1.msra.mxu0 0.0
        %456 = vmatprep.subr.mxu0 0.0
        %457 = vmatpush1.msra.mxu0 0.0
        %458 = vmatprep.subr.mxu0 0.0
        %459 = vmatpush1.msra.mxu0 0.0
        %460 = vmatprep.subr.mxu0 0.0
        %461 = vmatpush1.msra.mxu0 0.0
        %462 = vmatprep.subr.mxu0 0.0
        %463 = vmatpush1.msra.mxu0 0.0
        %464 = vmatprep.subr.mxu0 0.0
        %465 = vmatpush1.msra.mxu0 0.0
        %466 = vmatprep.subr.mxu0 0.0
        %467 = vmatpush1.msra.mxu0 0.0
        %468 = vmatprep.subr.mxu0 0.0
        %469 = vmatpush1.msra.mxu0 0.0
        %470 = vmatprep.subr.mxu0 0.0
        %471 = vmatpush1.msra.mxu0 0.0
        %472 = vmatprep.subr.mxu0 0.0
        %473 = vmatpush1.msra.mxu0 0.0
        %474 = vmatprep.subr.mxu0 0.0
        %475 = vmatpush1.msra.mxu0 0.0
        %476 = vmatprep.subr.mxu0 0.0
        %477 = vmatpush1.msra.mxu0 0.0
        %478 = vmatprep.subr.mxu0 0.0
        %479 = vmatpush1.msra.mxu0 0.0
        %480 = vmatprep.subr.mxu0 0.0
        %481 = vmatpush1.msra.mxu0 0.0
        %482 = vmatprep.subr.mxu0 0.0
        %483 = vmatpush1.msra.mxu0 0.0
        %484 = vmatprep.subr.mxu0 0.0
        %485 = vmatpush1.msra.mxu0 0.0
        %486 = vmatprep.subr.mxu0 0.0
        %487 = vmatpush1.msra.mxu0 0.0
        %488 = vmatprep.subr.mxu0 0.0
        %489 = vmatpush1.msra.mxu0 0.0
        %490 = vmatprep.subr.mxu0 0.0
        %491 = vmatpush1.msra.mxu0 0.0
        %492 = vmatprep.subr.mxu0 0.0
        %493 = vmatpush1.msra.mxu0 0.0
        %494 = vmatprep.subr.mxu0 0.0
        %495 = vmatpush1.msra.mxu0 0.0
        %496 = vmatprep.subr.mxu0 0.0
        %497 = vmatpush1.msra.mxu0 0.0
        %498 = vmatprep.subr.mxu0 0.0
        %499 = vmatpush1.msra.mxu0 0.0
        %500 = vmatprep.subr.mxu0 0.0
        %501 = vmatpush1.msra.mxu0 0.0
        %502 = vmatprep.subr.mxu0 0.0
        %503 = vmatpush1.msra.mxu0 0.0
        %504 = vmatprep.subr.mxu0 0.0
        %505 = vmatpush1.msra.mxu0 0.0
        %506 = vmatprep.subr.mxu0 0.0
        %507 = vmatpush1.msra.mxu0 0.0
        %508 = vmatprep.subr.mxu0 0.0
        %509 = vmatpush1.msra.mxu0 0.0
        %510 = vmatprep.mubr.f32.mxu0 0.0
        %511 = vmatmul.mubr.f32.gmra.mrb[0].mxu0 %v435
        %v512 = vpop.f32.mrb[0].mxu0
        %v513 = vadd.f32 %v431, %v512
        %v514 = vpop.f32.mrb[0].mxu0
        %515 = vmatprep.mubr.f32.mxu0 0.0
        %516 = vmatmul.mubr.f32.gmra.mrb[0].mxu0 %v438
        %v517 = vpop.f32.mrb[0].mxu0
        %v518 = vadd.f32 %v431, %v517
        %v519 = vpop.f32.mrb[0].mxu0
        %520 = vmatprep.mubr.f32.mxu0 0.0
        %521 = vmatmul.mubr.f32.gmra.mrb[0].mxu0 %v441
        %v522 = vpop.f32.mrb[0].mxu0
        %v523 = vadd.f32 %v431, %v522
        %v524 = vpop.f32.mrb[0].mxu0
        %525 = vmatprep.mubr.f32.mxu0 0.0
        %526 = vmatmul.mubr.f32.gmra.mrb[0].mxu0 %v444
        %v527 = vpop.f32.mrb[0].mxu0
        %v528 = vadd.f32 %v431, %v527
        %v529 = vpop.f32.mrb[0].mxu0
        %530 = vdwg.mxu0
        %531 = vst [vmem:[#allocation2] sm:$0xff] %v513
        %532 = vst [vmem:[#allocation2 + $0x8] sm:$0xff] %v518
        %533 = vst [vmem:[#allocation2 + $0x10] sm:$0xff] %v523
        %534 = vst [vmem:[#allocation2 + $0x18] sm:$0xff] %v528
        %v535 = vld [vmem:[#allocation10] sm:$0xff]
        %v536 = vld [vmem:[#allocation10 + $0x8] sm:$0xff]
        %v537 = vld [vmem:[#allocation10 + $0x10] sm:$0xff]
        %v538 = vld [vmem:[#allocation10 + $0x18] sm:$0xff]
        %v539 = vld [vmem:[#allocation3] sm:$0xff]
        %v540 = vld [vmem:[#allocation4] sm:$0xff]
        %v541 = vld [vmem:[#allocation2] sm:$0xff]
        %vm542 = vcmask 261120
        %v544 = vsel %vm542, %v539, 0
        %546 = vmatprep.subr.mxu0 0.0
        %547 = vmatpush1.msra.mxu0 %v535
        %548 = vmatprep.subr.mxu0 0.0
        %549 = vmatpush1.msra.mxu0 %v536
        %550 = vmatprep.subr.mxu0 0.0
        %551 = vmatpush1.msra.mxu0 %v537
        %552 = vmatprep.subr.mxu0 0.0
        %553 = vmatpush1.msra.mxu0 %v538
        %554 = vmatprep.subr.mxu0 0.0
        %555 = vmatpush1.msra.mxu0 0.0
        %556 = vmatprep.subr.mxu0 0.0
        %557 = vmatpush1.msra.mxu0 0.0
        %558 = vmatprep.subr.mxu0 0.0
        %559 = vmatpush1.msra.mxu0 0.0
        %560 = vmatprep.subr.mxu0 0.0
        %561 = vmatpush1.msra.mxu0 0.0
        %562 = vmatprep.subr.mxu0 0.0
        %563 = vmatpush1.msra.mxu0 0.0
        %564 = vmatprep.subr.mxu0 0.0
        %565 = vmatpush1.msra.mxu0 0.0
        %566 = vmatprep.subr.mxu0 0.0
        %567 = vmatpush1.msra.mxu0 0.0
        %568 = vmatprep.subr.mxu0 0.0
        %569 = vmatpush1.msra.mxu0 0.0
        %570 = vmatprep.subr.mxu0 0.0
        %571 = vmatpush1.msra.mxu0 0.0
        %572 = vmatprep.subr.mxu0 0.0
        %573 = vmatpush1.msra.mxu0 0.0
        %574 = vmatprep.subr.mxu0 0.0
        %575 = vmatpush1.msra.mxu0 0.0
        %576 = vmatprep.subr.mxu0 0.0
        %577 = vmatpush1.msra.mxu0 0.0
        %578 = vmatprep.subr.mxu0 0.0
        %579 = vmatpush1.msra.mxu0 0.0
        %580 = vmatprep.subr.mxu0 0.0
        %581 = vmatpush1.msra.mxu0 0.0
        %582 = vmatprep.subr.mxu0 0.0
        %583 = vmatpush1.msra.mxu0 0.0
        %584 = vmatprep.subr.mxu0 0.0
        %585 = vmatpush1.msra.mxu0 0.0
        %586 = vmatprep.subr.mxu0 0.0
        %587 = vmatpush1.msra.mxu0 0.0
        %588 = vmatprep.subr.mxu0 0.0
        %589 = vmatpush1.msra.mxu0 0.0
        %590 = vmatprep.subr.mxu0 0.0
        %591 = vmatpush1.msra.mxu0 0.0
        %592 = vmatprep.subr.mxu0 0.0
        %593 = vmatpush1.msra.mxu0 0.0
        %594 = vmatprep.subr.mxu0 0.0
        %595 = vmatpush1.msra.mxu0 0.0
        %596 = vmatprep.subr.mxu0 0.0
        %597 = vmatpush1.msra.mxu0 0.0
        %598 = vmatprep.subr.mxu0 0.0
        %599 = vmatpush1.msra.mxu0 0.0
        %600 = vmatprep.subr.mxu0 0.0
        %601 = vmatpush1.msra.mxu0 0.0
        %602 = vmatprep.subr.mxu0 0.0
        %603 = vmatpush1.msra.mxu0 0.0
        %604 = vmatprep.subr.mxu0 0.0
        %605 = vmatpush1.msra.mxu0 0.0
        %606 = vmatprep.subr.mxu0 0.0
        %607 = vmatpush1.msra.mxu0 0.0
        %608 = vmatprep.subr.mxu0 0.0
        %609 = vmatpush1.msra.mxu0 0.0
        %610 = vmatprep.mubr.f32.mxu0 0.0
        %611 = vmatmul.mubr.f32.gmra.mrb[0].mxu0 %v544
        %v612 = vpop.f32.mrb[0].mxu0
        %v613 = vadd.f32 0.0, %v612
        %v614 = vpop.f32.mrb[0].mxu0
        %615 = vdwg.mxu0
        %v616 = vadd.f32 %v541, %v613
        %v617 = vxor.u32 %v616, 2147483648
        %v618 = vmul.f32 %v617, 1.442695
        %v619 = vpow.pop %v618
        %v620 = vadd.f32 %v619, 1.0
        %v621 = vrcp.pop %v620
        %v622 = vmul.f32 1.0, %v621
        %v623 = vtanh.pop %v616
        %625 = vrot.lane.b32.xlu0 %v540, 32
        %v626 = vpop.permute.xlu0 %625
        %v628 = vmul.f32 %v622, %v626
        %630 = vrot.lane.b32.xlu0 %v623, 32
        %v631 = vpop.permute.xlu0 %630
        %v633 = vmul.f32 %v622, %v631
        %635 = vrot.lane.b32.xlu0 %v633, 32
        %v636 = vpop.permute.xlu0 %635
        %v638 = vadd.f32 %v628, %v636
        %v639 = vtanh.pop %v638
        %641 = vrot.lane.b32.xlu0 %v639, 32
        %v642 = vpop.permute.xlu0 %641
        %v644 = vmul.f32 %v622, %v642
        %s645 = scalar_lea.vmem [#allocation2], 8
        %v646 = vld [vmem:[%s645] sm:$0xff]
        %648 = vrot.lane.b32.xlu0 %v644, 64
        %v649 = vpop.permute.xlu0 %648
        %v650 = vsel %vm542, %v649, 0
        %652 = vmatprep.subr.mxu0 0.0
        %653 = vmatpush1.msra.mxu0 %v535
        %654 = vmatprep.subr.mxu0 0.0
        %655 = vmatpush1.msra.mxu0 %v536
        %656 = vmatprep.subr.mxu0 0.0
        %657 = vmatpush1.msra.mxu0 %v537
        %658 = vmatprep.subr.mxu0 0.0
        %659 = vmatpush1.msra.mxu0 %v538
        %660 = vmatprep.subr.mxu0 0.0
        %661 = vmatpush1.msra.mxu0 0.0
        %662 = vmatprep.subr.mxu0 0.0
        %663 = vmatpush1.msra.mxu0 0.0
        %664 = vmatprep.subr.mxu0 0.0
        %665 = vmatpush1.msra.mxu0 0.0
        %666 = vmatprep.subr.mxu0 0.0
        %667 = vmatpush1.msra.mxu0 0.0
        %668 = vmatprep.subr.mxu0 0.0
        %669 = vmatpush1.msra.mxu0 0.0
        %670 = vmatprep.subr.mxu0 0.0
        %671 = vmatpush1.msra.mxu0 0.0
        %672 = vmatprep.subr.mxu0 0.0
        %673 = vmatpush1.msra.mxu0 0.0
        %674 = vmatprep.subr.mxu0 0.0
        %675 = vmatpush1.msra.mxu0 0.0
        %676 = vmatprep.subr.mxu0 0.0
        %677 = vmatpush1.msra.mxu0 0.0
        %678 = vmatprep.subr.mxu0 0.0
        %679 = vmatpush1.msra.mxu0 0.0
        %680 = vmatprep.subr.mxu0 0.0
        %681 = vmatpush1.msra.mxu0 0.0
        %682 = vmatprep.subr.mxu0 0.0
        %683 = vmatpush1.msra.mxu0 0.0
        %684 = vmatprep.subr.mxu0 0.0
        %685 = vmatpush1.msra.mxu0 0.0
        %686 = vmatprep.subr.mxu0 0.0
        %687 = vmatpush1.msra.mxu0 0.0
        %688 = vmatprep.subr.mxu0 0.0
        %689 = vmatpush1.msra.mxu0 0.0
        %690 = vmatprep.subr.mxu0 0.0
        %691 = vmatpush1.msra.mxu0 0.0
        %692 = vmatprep.subr.mxu0 0.0
        %693 = vmatpush1.msra.mxu0 0.0
        %694 = vmatprep.subr.mxu0 0.0
        %695 = vmatpush1.msra.mxu0 0.0
        %696 = vmatprep.subr.mxu0 0.0
        %697 = vmatpush1.msra.mxu0 0.0
        %698 = vmatprep.subr.mxu0 0.0
        %699 = vmatpush1.msra.mxu0 0.0
        %700 = vmatprep.subr.mxu0 0.0
        %701 = vmatpush1.msra.mxu0 0.0
        %702 = vmatprep.subr.mxu0 0.0
        %703 = vmatpush1.msra.mxu0 0.0
        %704 = vmatprep.subr.mxu0 0.0
        %705 = vmatpush1.msra.mxu0 0.0
        %706 = vmatprep.subr.mxu0 0.0
        %707 = vmatpush1.msra.mxu0 0.0
        %708 = vmatprep.subr.mxu0 0.0
        %709 = vmatpush1.msra.mxu0 0.0
        %710 = vmatprep.subr.mxu0 0.0
        %711 = vmatpush1.msra.mxu0 0.0
        %712 = vmatprep.subr.mxu0 0.0
        %713 = vmatpush1.msra.mxu0 0.0
        %714 = vmatprep.subr.mxu0 0.0
        %715 = vmatpush1.msra.mxu0 0.0
        %716 = vmatprep.mubr.f32.mxu0 0.0
        %717 = vmatmul.mubr.f32.gmra.mrb[0].mxu0 %v650
        %v718 = vpop.f32.mrb[0].mxu0
        %v719 = vadd.f32 0.0, %v718
        %v720 = vpop.f32.mrb[0].mxu0
        %721 = vdwg.mxu0
        %v722 = vadd.f32 %v646, %v719
        %v723 = vxor.u32 %v722, 2147483648
        %v724 = vmul.f32 %v723, 1.442695
        %v725 = vpow.pop %v724
        %v726 = vadd.f32 %v725, 1.0
        %v727 = vrcp.pop %v726
        %v728 = vmul.f32 1.0, %v727
        %v729 = vtanh.pop %v722
        %v730 = vmul.f32 %v728, %v638
        %732 = vrot.lane.b32.xlu0 %v729, 32
        %v733 = vpop.permute.xlu0 %732
        %v735 = vmul.f32 %v728, %v733
        %737 = vrot.lane.b32.xlu0 %v735, 32
        %v738 = vpop.permute.xlu0 %737
        %v740 = vadd.f32 %v730, %v738
        %v741 = vtanh.pop %v740
        %743 = vrot.lane.b32.xlu0 %v741, 32
        %v744 = vpop.permute.xlu0 %743
        %v746 = vmul.f32 %v728, %v744
        %s747 = scalar_lea.vmem [#allocation2], 16
        %v748 = vld [vmem:[%s747] sm:$0xff]
        %750 = vrot.lane.b32.xlu0 %v746, 64
        %v751 = vpop.permute.xlu0 %750
        %v752 = vsel %vm542, %v751, 0
        %754 = vmatprep.subr.mxu0 0.0
        %755 = vmatpush1.msra.mxu0 %v535
        %756 = vmatprep.subr.mxu0 0.0
        %757 = vmatpush1.msra.mxu0 %v536
        %758 = vmatprep.subr.mxu0 0.0
        %759 = vmatpush1.msra.mxu0 %v537
        %760 = vmatprep.subr.mxu0 0.0
        %761 = vmatpush1.msra.mxu0 %v538
        %762 = vmatprep.subr.mxu0 0.0
        %763 = vmatpush1.msra.mxu0 0.0
        %764 = vmatprep.subr.mxu0 0.0
        %765 = vmatpush1.msra.mxu0 0.0
        %766 = vmatprep.subr.mxu0 0.0
        %767 = vmatpush1.msra.mxu0 0.0
        %768 = vmatprep.subr.mxu0 0.0
        %769 = vmatpush1.msra.mxu0 0.0
        %770 = vmatprep.subr.mxu0 0.0
        %771 = vmatpush1.msra.mxu0 0.0
        %772 = vmatprep.subr.mxu0 0.0
        %773 = vmatpush1.msra.mxu0 0.0
        %774 = vmatprep.subr.mxu0 0.0
        %775 = vmatpush1.msra.mxu0 0.0
        %776 = vmatprep.subr.mxu0 0.0
        %777 = vmatpush1.msra.mxu0 0.0
        %778 = vmatprep.subr.mxu0 0.0
        %779 = vmatpush1.msra.mxu0 0.0
        %780 = vmatprep.subr.mxu0 0.0
        %781 = vmatpush1.msra.mxu0 0.0
        %782 = vmatprep.subr.mxu0 0.0
        %783 = vmatpush1.msra.mxu0 0.0
        %784 = vmatprep.subr.mxu0 0.0
        %785 = vmatpush1.msra.mxu0 0.0
        %786 = vmatprep.subr.mxu0 0.0
        %787 = vmatpush1.msra.mxu0 0.0
        %788 = vmatprep.subr.mxu0 0.0
        %789 = vmatpush1.msra.mxu0 0.0
        %790 = vmatprep.subr.mxu0 0.0
        %791 = vmatpush1.msra.mxu0 0.0
        %792 = vmatprep.subr.mxu0 0.0
        %793 = vmatpush1.msra.mxu0 0.0
        %794 = vmatprep.subr.mxu0 0.0
        %795 = vmatpush1.msra.mxu0 0.0
        %796 = vmatprep.subr.mxu0 0.0
        %797 = vmatpush1.msra.mxu0 0.0
        %798 = vmatprep.subr.mxu0 0.0
        %799 = vmatpush1.msra.mxu0 0.0
        %800 = vmatprep.subr.mxu0 0.0
        %801 = vmatpush1.msra.mxu0 0.0
        %802 = vmatprep.subr.mxu0 0.0
        %803 = vmatpush1.msra.mxu0 0.0
        %804 = vmatprep.subr.mxu0 0.0
        %805 = vmatpush1.msra.mxu0 0.0
        %806 = vmatprep.subr.mxu0 0.0
        %807 = vmatpush1.msra.mxu0 0.0
        %808 = vmatprep.subr.mxu0 0.0
        %809 = vmatpush1.msra.mxu0 0.0
        %810 = vmatprep.subr.mxu0 0.0
        %811 = vmatpush1.msra.mxu0 0.0
        %812 = vmatprep.subr.mxu0 0.0
        %813 = vmatpush1.msra.mxu0 0.0
        %814 = vmatprep.subr.mxu0 0.0
        %815 = vmatpush1.msra.mxu0 0.0
        %816 = vmatprep.subr.mxu0 0.0
        %817 = vmatpush1.msra.mxu0 0.0
        %818 = vmatprep.mubr.f32.mxu0 0.0
        %819 = vmatmul.mubr.f32.gmra.mrb[0].mxu0 %v752
        %v820 = vpop.f32.mrb[0].mxu0
        %v821 = vadd.f32 0.0, %v820
        %v822 = vpop.f32.mrb[0].mxu0
        %823 = vdwg.mxu0
        %v824 = vadd.f32 %v748, %v821
        %v825 = vxor.u32 %v824, 2147483648
        %v826 = vmul.f32 %v825, 1.442695
        %v827 = vpow.pop %v826
        %v828 = vadd.f32 %v827, 1.0
        %v829 = vrcp.pop %v828
        %v830 = vmul.f32 1.0, %v829
        %v831 = vtanh.pop %v824
        %v832 = vmul.f32 %v830, %v740
        %834 = vrot.lane.b32.xlu0 %v831, 32
        %v835 = vpop.permute.xlu0 %834
        %v837 = vmul.f32 %v830, %v835
        %839 = vrot.lane.b32.xlu0 %v837, 32
        %v840 = vpop.permute.xlu0 %839
        %v842 = vadd.f32 %v832, %v840
        %v843 = vtanh.pop %v842
        %845 = vrot.lane.b32.xlu0 %v843, 32
        %v846 = vpop.permute.xlu0 %845
        %v848 = vmul.f32 %v830, %v846
        %s849 = scalar_lea.vmem [#allocation2], 24
        %v850 = vld [vmem:[%s849] sm:$0xff]
        %852 = vrot.lane.b32.xlu0 %v848, 64
        %v853 = vpop.permute.xlu0 %852
        %v854 = vsel %vm542, %v853, 0
        %856 = vmatprep.subr.mxu0 0.0
        %857 = vmatpush1.msra.mxu0 %v535
        %858 = vmatprep.subr.mxu0 0.0
        %859 = vmatpush1.msra.mxu0 %v536
        %860 = vmatprep.subr.mxu0 0.0
        %861 = vmatpush1.msra.mxu0 %v537
        %862 = vmatprep.subr.mxu0 0.0
        %863 = vmatpush1.msra.mxu0 %v538
        %864 = vmatprep.subr.mxu0 0.0
        %865 = vmatpush1.msra.mxu0 0.0
        %866 = vmatprep.subr.mxu0 0.0
        %867 = vmatpush1.msra.mxu0 0.0
        %868 = vmatprep.subr.mxu0 0.0
        %869 = vmatpush1.msra.mxu0 0.0
        %870 = vmatprep.subr.mxu0 0.0
        %871 = vmatpush1.msra.mxu0 0.0
        %872 = vmatprep.subr.mxu0 0.0
        %873 = vmatpush1.msra.mxu0 0.0
        %874 = vmatprep.subr.mxu0 0.0
        %875 = vmatpush1.msra.mxu0 0.0
        %876 = vmatprep.subr.mxu0 0.0
        %877 = vmatpush1.msra.mxu0 0.0
        %878 = vmatprep.subr.mxu0 0.0
        %879 = vmatpush1.msra.mxu0 0.0
        %880 = vmatprep.subr.mxu0 0.0
        %881 = vmatpush1.msra.mxu0 0.0
        %882 = vmatprep.subr.mxu0 0.0
        %883 = vmatpush1.msra.mxu0 0.0
        %884 = vmatprep.subr.mxu0 0.0
        %885 = vmatpush1.msra.mxu0 0.0
        %886 = vmatprep.subr.mxu0 0.0
        %887 = vmatpush1.msra.mxu0 0.0
        %888 = vmatprep.subr.mxu0 0.0
        %889 = vmatpush1.msra.mxu0 0.0
        %890 = vmatprep.subr.mxu0 0.0
        %891 = vmatpush1.msra.mxu0 0.0
        %892 = vmatprep.subr.mxu0 0.0
        %893 = vmatpush1.msra.mxu0 0.0
        %894 = vmatprep.subr.mxu0 0.0
        %895 = vmatpush1.msra.mxu0 0.0
        %896 = vmatprep.subr.mxu0 0.0
        %897 = vmatpush1.msra.mxu0 0.0
        %898 = vmatprep.subr.mxu0 0.0
        %899 = vmatpush1.msra.mxu0 0.0
        %900 = vmatprep.subr.mxu0 0.0
        %901 = vmatpush1.msra.mxu0 0.0
        %902 = vmatprep.subr.mxu0 0.0
        %903 = vmatpush1.msra.mxu0 0.0
        %904 = vmatprep.subr.mxu0 0.0
        %905 = vmatpush1.msra.mxu0 0.0
        %906 = vmatprep.subr.mxu0 0.0
        %907 = vmatpush1.msra.mxu0 0.0
        %908 = vmatprep.subr.mxu0 0.0
        %909 = vmatpush1.msra.mxu0 0.0
        %910 = vmatprep.subr.mxu0 0.0
        %911 = vmatpush1.msra.mxu0 0.0
        %912 = vmatprep.subr.mxu0 0.0
        %913 = vmatpush1.msra.mxu0 0.0
        %914 = vmatprep.subr.mxu0 0.0
        %915 = vmatpush1.msra.mxu0 0.0
        %916 = vmatprep.subr.mxu0 0.0
        %917 = vmatpush1.msra.mxu0 0.0
        %918 = vmatprep.subr.mxu0 0.0
        %919 = vmatpush1.msra.mxu0 0.0
        %920 = vmatprep.mubr.f32.mxu0 0.0
        %921 = vmatmul.mubr.f32.gmra.mrb[0].mxu0 %v854
        %v922 = vpop.f32.mrb[0].mxu0
        %v923 = vadd.f32 0.0, %v922
        %v924 = vpop.f32.mrb[0].mxu0
        %925 = vdwg.mxu0
        %v926 = vadd.f32 %v850, %v923
        %v927 = vxor.u32 %v926, 2147483648
        %v928 = vmul.f32 %v927, 1.442695
        %v929 = vpow.pop %v928
        %v930 = vadd.f32 %v929, 1.0
        %v931 = vrcp.pop %v930
        %v932 = vmul.f32 1.0, %v931
        %v933 = vtanh.pop %v926
        %v934 = vmul.f32 %v932, %v842
        %936 = vrot.lane.b32.xlu0 %v933, 32
        %v937 = vpop.permute.xlu0 %936
        %v939 = vmul.f32 %v932, %v937
        %941 = vrot.lane.b32.xlu0 %v939, 32
        %v942 = vpop.permute.xlu0 %941
        %v944 = vadd.f32 %v934, %v942
        %v945 = vtanh.pop %v944
        %947 = vrot.lane.b32.xlu0 %v945, 32
        %v948 = vpop.permute.xlu0 %947
        %v950 = vmul.f32 %v932, %v948
        %952 = vrot.lane.b32.xlu0 %v746, 96
        %v953 = vpop.permute.xlu0 %952
        %956 = vrot.lane.b32.xlu0 %v950, 32
        %v957 = vpop.permute.xlu0 %956
        %v959 = vsel %vm542, %v649, %v953
        %vm960 = vcmask 523264
        %v961 = vsel %vm960, %v959, %v848
        %vm962 = vcmask 785408
        %v963 = vsel %vm962, %v961, %v957
        %964 = vst [vmem:[%s397] sm:$0xff] %v963
        %965 = vrot.lane.b32.xlu0 %v950, 64
        %v966 = vpop.permute.xlu0 %965
        %968 = vst.msk [vmem:[#allocation3] sm:$0xff] %vm542, %v966
        %970 = vrot.lane.b32.xlu0 %v944, 96
        %v971 = vpop.permute.xlu0 %970
        %973 = vst.msk [vmem:[#allocation4] sm:$0xff] %vm542, %v971
        %974 = vst.msk [vmem:[#allocation12] sm:$0xff] %vm542, %v966
        %975 = vst.msk [vmem:[#allocation14] sm:$0xff] %vm542, %v971
        %s976 = sand.u32 %s193, 1
        %s977 = scalar_lea.sflag [#allocation7], %s976
        %s978 = sand.u32 %s193, 1
        %s979 = smul.addr %s978, 8
        %s980 = scalar_lea.vmem [#allocation11], %s979
        // Predicated region
        $region61: #{tpu_custom_call.1} parent=43 // pred_check
          %p981 = pneg %p203
        $region62: #{tpu_custom_call.1} parent=43 // pred_check_branch
          %983 = sbr.rel (%p981) target = $region64
        $region63: #{tpu_custom_call.1} parent=43 // pred_region
          %s985 = ssub.s32 128, 128
          %986 = vsyncadd %s977, %s985
          %s987 = sadd.s32 %s32, %s33
          %s988 = smul.addr %s987, 128
          %s989 = scalar_lea.hbm %s6, %s988
          %s991 = sshll.u32 %s980, 4
          %s992 = int_to_ptr.vmem [resolvable:$true] %s991
          %994 = dma.vmem_to_hbm [thread:$0]  %s992, 128, %s989, %s977
        $region64: #{tpu_custom_call.1} parent=43 // pred_fallthru
          _
        // Predicated region
        $region65: #{tpu_custom_call.1} parent=43 // pred_check
          %p995 = pneg %p229
        $region66: #{tpu_custom_call.1} parent=43 // pred_check_branch
          %997 = sbr.rel (%p995) target = $region68
        $region67: #{tpu_custom_call.1} parent=43 // pred_region
          %s999 = ssub.s32 128, 128
          %1000 = vsyncadd [#allocation13], %s999
          %s1001 = smul.addr %s32, 128
          %s1002 = scalar_lea.hbm %s7, %s1001
          %s1004 = sshll.u32 [#allocation12], 4
          %s1005 = int_to_ptr.vmem [resolvable:$true] %s1004
          %1007 = dma.vmem_to_hbm [thread:$0]  %s1005, 128, %s1002, [#allocation13]
        $region68: #{tpu_custom_call.1} parent=43 // pred_fallthru
          _
        // Predicated region
        $region69: #{tpu_custom_call.1} parent=43 // pred_check
          %p1008 = pneg %p255
        $region70: #{tpu_custom_call.1} parent=43 // pred_check_branch
          %1010 = sbr.rel (%p1008) target = $region72
        $region71: #{tpu_custom_call.1} parent=43 // pred_region
          %s1012 = ssub.s32 128, 128
          %1013 = vsyncadd [#allocation13], %s1012
          %s1014 = smul.addr %s32, 128
          %s1015 = scalar_lea.hbm %s8, %s1014
          %s1017 = sshll.u32 [#allocation14], 4
          %s1018 = int_to_ptr.vmem [resolvable:$true] %s1017
          %1020 = dma.vmem_to_hbm [thread:$0]  %s1018, 128, %s1015, [#allocation13]
        $region72: #{tpu_custom_call.1} parent=43 // pred_fallthru
          _
        // Predicated region
        $region73: #{tpu_custom_call.1} parent=43 // pred_check
          %p1021 = pneg %p229
        $region74: #{tpu_custom_call.1} parent=43 // pred_check_branch
          %1023 = sbr.rel (%p1021) target = $region76
        $region75: #{tpu_custom_call.1} parent=43 // pred_region
          %1024 = dma.done [#allocation13], 128
        $region76: #{tpu_custom_call.1} parent=43 // pred_fallthru
          _
        // Predicated region
        $region77: #{tpu_custom_call.1} parent=43 // pred_check
          %p1025 = pneg %p255
        $region78: #{tpu_custom_call.1} parent=43 // pred_check_branch
          %1027 = sbr.rel (%p1025) target = $region80
        $region79: #{tpu_custom_call.1} parent=43 // pred_region
          %1028 = dma.done [#allocation13], 128
        $region80: #{tpu_custom_call.1} parent=43 // pred_fallthru
          _
      $region44: #{tpu_custom_call.1} parent=5 // pred_fallthru
        _
      %p1029 = scmp.le.s32.totalorder 2, %s23
      // Predicated region
      $region81: #{tpu_custom_call.1} parent=5 // pred_check
        %p1030 = pneg %p1029
      $region82: #{tpu_custom_call.1} parent=5 // pred_check_branch
        %1032 = sbr.rel (%p1030) target = $region84
      $region83: #{tpu_custom_call.1} parent=5 // pred_region
        %s1033 = ssub.s32 %s23, 2
        // Predicated region
        $region85: #{tpu_custom_call.1} parent=83 // pred_check
          %p1034 = pneg %p209
        $region86: #{tpu_custom_call.1} parent=83 // pred_check_branch
          %1036 = sbr.rel (%p1034) target = $region88
        $region87: #{tpu_custom_call.1} parent=83 // pred_region
          %s1037 = sand.u32 %s194, 1
          %s1038 = scalar_lea.sflag [#allocation7], %s1037
          %s1039 = sand.u32 %s194, 1
          %s1040 = smul.addr %s1039, 8
          %s1041 = scalar_lea.vmem [#allocation11], %s1040
          %1042 = dma.done %s1038, 128
        $region88: #{tpu_custom_call.1} parent=83 // pred_fallthru
          _
      $region84: #{tpu_custom_call.1} parent=5 // pred_fallthru
        _
    $region6: #{tpu_custom_call.1} parent=1 // loop_footer
      %s27 = sadd.s32 1, %s23
    $region7: #{tpu_custom_call.1} parent=1 // loop_footer_branch
      %22 = sbr.rel target = $region3
    $region8: #{tpu_custom_call.1} parent=1 // loop_exit
      _
    %1043 = vsyncpa [#allocation6], 1
    %s1044 = scalar_lea.sflag [#allocation6], 1
    %1045 = vsyncpa %s1044, 1
    %1046 = vsyncpa [#allocation9], 1
    %1047 = vsyncpa [#allocation7], 1
    %s1048 = scalar_lea.sflag [#allocation7], 1
    %1049 = vsyncpa %s1048, 1
    %1050 = vsyncpa [#allocation13], 1

</llo_original>
